<compile_context>
chip_gen: v5e
topology: v5e:2x2
jax: 0.10.0
libtpu: 0.0.40
codegen_flags: <defaults>
</compile_context>

<pallas_src>
import functools

import jax
import jax.numpy as jnp
from jax.experimental import pallas as pl
from jax.experimental.pallas import tpu as pltpu

_LANE = 128
_TILE_BYTES = 4 * 1024 * 1024  # target bytes per output buffer (Pallas double-buffers)


def _pe_kernel(tab_ref, out_ref, *, per_row: float):
    # tab_ref: (3, L) f32 resident table: row0 = angles, row1 = phase, row2 = pos offset
    # out_ref: (TILE_R, L) f32
    tile_r, _ = out_ref.shape
    tab = tab_ref[...]
    ang = tab[0:1, :]      # (1, L)
    phase = tab[1:2, :]    # (1, L)  (0 for sin columns, pi/2 for cos columns)
    posoff = tab[2:3, :]   # (1, L)  (intra-row position offset for lane-dense packing)

    base = pl.program_id(0) * tile_r
    row = jax.lax.broadcasted_iota(jnp.int32, out_ref.shape, 0) + base      # (TILE_R, L)
    pos = row.astype(jnp.float32) * jnp.float32(per_row) + posoff           # (TILE_R, L)

    # cos(x) for odd columns is folded into the phase row: cos(x) == sin(x + pi/2).
    out_ref[...] = jnp.sin(pos * ang + phase)


def _angles_and_phase(d_model: int):
    # Deterministic "buffer" init, identical to the PyTorch __encode_embedding.
    a = jnp.arange(d_model, dtype=jnp.int32)
    even = (a - (a % 2)).astype(jnp.float32)                     # [0,0,2,2,4,4,...]
    ang = 1.0 / jnp.power(jnp.float32(10000.0), even / jnp.float32(d_model))
    phase = (a % 2).astype(jnp.float32) * jnp.float32(jnp.pi / 2.0)
    return ang.astype(jnp.float32), phase.astype(jnp.float32)


def positional_encoding(n_ctx: int, d_model: int) -> jnp.ndarray:
    """Returns (1, n_ctx, d_model) float32, matching PositionalEncoding.forward(n_ctx)."""
    ang, phase = _angles_and_phase(d_model)

    # Lane-dense repack for small d_model: write the output as (n_ctx*d_model/128, 128)
    # so stores are full-width, then reshape back (row-major, so a free view).
    lane_dense = (d_model < _LANE) and (_LANE % d_model == 0) and ((n_ctx * d_model) % _LANE == 0)
    if lane_dense:
        k = _LANE // d_model
        L = _LANE
        R = (n_ctx * d_model) // _LANE
        ang_row = jnp.tile(ang, k)
        phase_row = jnp.tile(phase, k)
        posoff = (jnp.arange(_LANE, dtype=jnp.int32) // d_model).astype(jnp.float32)
        per_row = float(k)
    else:
        L = d_model
        R = n_ctx
        ang_row = ang
        phase_row = phase
        posoff = jnp.zeros((d_model,), jnp.float32)
        per_row = 1.0

    tab = jnp.stack([ang_row, phase_row, posoff], axis=0)        # (3, L) f32, resident

    # Row tile sized to ~4 MiB per output buffer; multiple of 8 (sublane) when tiled,
    # or the full row extent when the whole output fits in one block.
    target_rows = max(8, ((_TILE_BYTES // (L * 4)) // 8) * 8)
    tile_r = R if R <= target_rows else target_rows
    grid = (pl.cdiv(R, tile_r),)

    out2d = pl.pallas_call(
        functools.partial(_pe_kernel, per_row=per_row),
        out_shape=jax.ShapeDtypeStruct((R, L), jnp.float32),
        grid=grid,
        in_specs=[pl.BlockSpec((3, L), lambda i: (0, 0))],       # constant index -> resident
        out_specs=pl.BlockSpec((tile_r, L), lambda i: (i, 0)),
        compiler_params=pltpu.CompilerParams(
            dimension_semantics=("parallel",),
            vmem_limit_bytes=32 * 1024 * 1024,
        ),
    )(tab)

    return out2d.reshape(1, n_ctx, d_model)


def _reference(n_ctx: int, d_model: int) -> jnp.ndarray:
    # Pure-JAX mirror of the PyTorch module (ground truth).
    a = jnp.arange(d_model, dtype=jnp.int32)
    even = (a - (a % 2)).astype(jnp.float32)
    angles = (1.0 / jnp.power(jnp.float32(10000.0), even / jnp.float32(d_model))).reshape(1, d_model)
    pos = jnp.arange(n_ctx, dtype=jnp.float32).reshape(n_ctx, 1)
    pa = pos @ angles
    col = jnp.arange(d_model)
    pa = jnp.where((col % 2) == 0, jnp.sin(pa), jnp.cos(pa))
    return pa[None]


if __name__ == "__main__":
    # No tensor inputs to this module (forward takes an int); key kept for convention.
    _ = jax.random.PRNGKey(0)

    # (16, 32) exercises the lane-dense path; (24, 128) exercises the general path.
    for n_ctx, d_model in ((16, 32), (24, 128)):
        out = jax.block_until_ready(positional_encoding(n_ctx, d_model))
        ref = _reference(n_ctx, d_model)
        assert out.shape == (1, n_ctx, d_model), out.shape
        assert out.dtype == jnp.float32, out.dtype
        assert jnp.allclose(out, ref, atol=1e-5, rtol=1e-5), f"mismatch vs reference at {(n_ctx, d_model)}"

    print("KERNEL_OK")
</pallas_src>

<mosaic_0001>
module attributes {stable_mosaic.version = 11 : i64} {
  func.func @_pe_kernel(%arg0: i32, %arg1: memref<3x128xf32, #tpu.memory_space<vmem>>, %arg2: memref<4x128xf32, #tpu.memory_space<vmem>>) attributes {dimension_semantics = [#tpu.dimension_semantics<parallel>], iteration_bounds = array<i64: 1>, scalar_prefetch = 0 : i64, scratch_operands = 0 : i64, tpu.core_type = #tpu.core_type<tc>, window_params = [{pipeline_mode = #tpu.pipeline_mode<synchronous>, transform_indices = @transform_0, window_bounds = array<i64: 3, 128>}, {transform_indices = @transform_1, window_bounds = array<i64: 4, 128>}]} {
    %c0 = arith.constant 0 : index
    %c0_0 = arith.constant 0 : index
    %0 = vector.load %arg1[%c0, %c0_0] : memref<3x128xf32, #tpu.memory_space<vmem>>, vector<3x128xf32>
    %1 = vector.extract_strided_slice %0 {offsets = [0, 0], sizes = [1, 128], strides = [1, 1]} : vector<3x128xf32> to vector<1x128xf32>
    %2 = vector.extract_strided_slice %0 {offsets = [1, 0], sizes = [1, 128], strides = [1, 1]} : vector<3x128xf32> to vector<1x128xf32>
    %3 = vector.extract_strided_slice %0 {offsets = [2, 0], sizes = [1, 128], strides = [1, 1]} : vector<3x128xf32> to vector<1x128xf32>
    %c4_i32 = arith.constant 4 : i32
    %4 = arith.muli %arg0, %c4_i32 : i32
    %5 = tpu.iota {dimensions = array<i32: 0>} : vector<4x128xi32>
    %6 = vector.broadcast %4 : i32 to vector<4x128xi32>
    %7 = arith.addi %5, %6 : vector<4x128xi32>
    %8 = arith.sitofp %7 : vector<4x128xi32> to vector<4x128xf32>
    %cst = arith.constant 4.000000e+00 : f32
    %9 = vector.broadcast %cst : f32 to vector<4x128xf32>
    %10 = arith.mulf %8, %9 : vector<4x128xf32>
    %11 = vector.broadcast %3 : vector<1x128xf32> to vector<4x128xf32>
    %12 = arith.addf %10, %11 : vector<4x128xf32>
    %13 = vector.broadcast %1 : vector<1x128xf32> to vector<4x128xf32>
    %14 = arith.mulf %12, %13 : vector<4x128xf32>
    %15 = vector.broadcast %2 : vector<1x128xf32> to vector<4x128xf32>
    %16 = arith.addf %14, %15 : vector<4x128xf32>
    %17 = math.sin %16 : vector<4x128xf32>
    %c0_1 = arith.constant 0 : index
    %c0_2 = arith.constant 0 : index
    %18 = vector.load %arg2[%c0_1, %c0_2] : memref<4x128xf32, #tpu.memory_space<vmem>>, vector<4x128xf32>
    tpu.vector_store %arg2[%c0_1, %c0_2], %17 {strides = array<i32>} : memref<4x128xf32, #tpu.memory_space<vmem>>, vector<4x128xf32>,
    return
  }
  func.func @transform_0(%arg0: i32) -> (i32, i32) {
    %c0_i32 = arith.constant 0 : i32
    %c0_i32_0 = arith.constant 0 : i32
    %c0_i32_1 = arith.constant 0 : i32
    return %c0_i32, %c0_i32_0 : i32, i32
  }
  func.func @transform_1(%arg0: i32) -> (i32, i32) {
    %c0_i32 = arith.constant 0 : i32
    %c0_i32_0 = arith.constant 0 : i32
    return %arg0, %c0_i32 : i32, i32
  }
}

</mosaic_0001>

<llo_original>
// kernel: tpu_custom_call.1
$region0: #{tpu_custom_call.1}
  #allocation0 [shape = 'u32[]', space=smem, size = 0x4, offset = 0x4, fixed_abs, tag = 'smem constant byte address 0x4 - core index']
  #allocation1 [shape = 'u32[72,128]{1,0:T(1,128)}', space=vmem, size = 0x9000, scoped, tag = 'internal scratch']
  %s0 = inlined_call_operand.hbm [shape: f32[3,128], index: 0, kind: input, shape index: {}]
  %s1 = inlined_call_operand.hbm [shape: f32[4,128], index: 1, kind: output, shape index: {}]
  %s2 = sld [smem:[#allocation0]]
  $region18: #{tpu_custom_call.1} parent=0
    _
  %s4 = ssub.s32 1, %s2
  %s5 = scalar_select 0, %s4, %s2
  $region1: #{tpu_custom_call.1} parent=0
    #allocation2 [shape = 'u8[2048]{0}', space=vmem, size = 0x800, scoped, tag = 'input window, operand 0, single buffered']
    #allocation3 [shape = 's32[1]{0}', space=sflag, size = 0x4, scoped, tag = 'scoped memory for tpu_custom_call.1']
    #allocation4 [shape = 's32[1]{0}', space=sflag, size = 0x4, scoped, tag = 'scoped memory for tpu_custom_call.1']
    #allocation5 [shape = 'u8[2048]{0}', space=vmem, size = 0x800, scoped, tag = 'output window, operand 0, single buffered']
    %6 = vsyncpa [#allocation3], 0
    %7 = vsyncpa [#allocation4], 0
    // Predicated region
    $region2: #{tpu_custom_call.1} parent=1 // pred_check
      _
    $region3: #{tpu_custom_call.1} parent=1 // pred_check_branch
      %9 = sbr.rel (0) target = $region5
    $region4: #{tpu_custom_call.1} parent=1 // pred_region
      %11 = vsyncadd [#allocation3], 0
      %s13 = sshll.u32 %s0, 4
      %s14 = int_to_ptr.hbm [resolvable:$true] %s13
      %s15 = sshll.u32 [#allocation2], 4
      %s16 = int_to_ptr.vmem [resolvable:$true] %s15
      %18 = dma.hbm_to_vmem [thread:$0]  %s14, 64, %s16, [#allocation3]
    $region5: #{tpu_custom_call.1} parent=1 // pred_fallthru
      _
    // Predicated region
    $region6: #{tpu_custom_call.1} parent=1 // pred_check
      _
    $region7: #{tpu_custom_call.1} parent=1 // pred_check_branch
      %20 = sbr.rel (0) target = $region9
    $region8: #{tpu_custom_call.1} parent=1 // pred_region
      %22 = dma.done [#allocation3], 64
    $region9: #{tpu_custom_call.1} parent=1 // pred_fallthru
      _
    %v23 = vld [vmem:[#allocation2] sm:$0x7]
    %s24 = smul.u32 0, 4
    %v25 = vlaneseq
    %v26 = vshrl.u32 %v25, 7
    %v27 = vstv %s24
    %v28 = vadd.s32 %v26, %v27
    %v29 = vcvt.s32.f32 %v28
    %v30 = vmul.f32 %v29, 4.0
    %v31 = vperm.slane %v23, 2
    %v32 = vadd.f32 %v30, %v31
    %v33 = vperm.slane %v23, 0
    %v34 = vmul.f32 %v32, %v33
    %v35 = vperm.slane %v23, 1
    %v36 = vadd.f32 %v34, %v35
    %v37 = vand.u32 2147483647, %v36
    %vm38 = vcmp.le.f32.partialorder %v37, 0.7853982
    %vm39 = vcmp.lt.s32.totalorder %v36, 0
    %v40 = vand.u32 %v36, 2139095040
    %v41 = vshrl.u32 %v40, 23
    %v42 = vsub.s32 %v41, 127
    %v43 = vand.u32 2147483647, %v36
    %v44 = vand.u32 %v43, 8388607
    %v45 = vor.u32 %v44, 8388608
    %v46 = vsub.s32 0, %v45
    %v47 = vadd.s32 %v42, 1
    %vm48 = vcmp.gt.s32.totalorder %v47, 0
    %v49 = vsel %vm48, %v47, 0
    %v50 = vshrl.u32 %v49, 5
    %v51 = vand.u32 %v49, 31
    %v52 = vsub.s32 32, %v51
    %v53 = vshrl.u32 683565275, %v52
    %v54 = vshll.u32 683565275, %v51
    %v55 = vshrl.u32 2475754826, %v52
    %v56 = vor.u32 %v54, %v55
    %v57 = vshll.u32 2475754826, %v51
    %v58 = vshrl.u32 2131351028, %v52
    %v59 = vor.u32 %v57, %v58
    %v60 = vshll.u32 2131351028, %v51
    %v61 = vshrl.u32 2102212464, %v52
    %v62 = vor.u32 %v60, %v61
    %v63 = vshll.u32 2102212464, %v51
    %v64 = vshrl.u32 920167782, %v52
    %v65 = vor.u32 %v63, %v64
    %v66 = vshll.u32 920167782, %v51
    %v67 = vshrl.u32 1326507024, %v52
    %v68 = vor.u32 %v66, %v67
    %vm69 = vcmp.lt.s32.totalorder %v50, 1
    %vm70 = vcmp.lt.s32.totalorder %v50, 2
    %vm71 = vcmp.lt.s32.totalorder %v50, 3
    %vm72 = vcmp.lt.s32.totalorder %v50, 4
    %v73 = vsel %vm69, %v53, %v56
    %v74 = vsel %vm72, %v62, 2102212464
    %v75 = vsel %vm71, %v59, %v74
    %v76 = vsel %vm70, %v73, %v75
    %v77 = vsel %vm69, %v56, %v59
    %v78 = vsel %vm72, %v65, 920167782
    %v79 = vsel %vm71, %v62, %v78
    %v80 = vsel %vm70, %v77, %v79
    %v81 = vsel %vm69, %v59, %v62
    %v82 = vsel %vm72, %v68, 1326507024
    %v83 = vsel %vm71, %v65, %v82
    %v84 = vsel %vm70, %v81, %v83
    %v85 = vshll.u32 %v45, 8
    %v86 = vand.u32 %v85, 65535
    %v87 = vshrl.u32 %v85, 16
    %v88 = vand.u32 %v84, 65535
    %v89 = vshrl.u32 %v84, 16
    %v90 = vmul.u32 %v86, %v88
    %v91 = vmul.u32 %v86, %v89
    %v92 = vmul.u32 %v87, %v88
    %v93 = vmul.u32 %v87, %v89
    %v94 = vshll.u32 %v91, 16
    %v95 = vshrl.u32 %v91, 16
    %v96 = vshll.u32 %v92, 16
    %v97 = vshrl.u32 %v92, 16
    %vm98 = vc.u32 %v90, %v94
    %v99 = vsel %vm98, 1, 0
    %v100 = vadd.s32 %v90, %v94
    %v101 = vadd.s32 %v93, %v99
    %vm102 = vc.u32 %v100, %v96
    %v103 = vsel %vm102, 1, 0
    %v104 = vadd.s32 %v100, %v96
    %v105 = vadd.s32 %v101, %v103
    %v106 = vadd.s32 %v105, %v95
    %v107 = vadd.s32 %v106, %v97
    %v108 = vand.u32 %v85, 65535
    %v109 = vshrl.u32 %v85, 16
    %v110 = vand.u32 %v80, 65535
    %v111 = vshrl.u32 %v80, 16
    %v112 = vmul.u32 %v108, %v110
    %v113 = vmul.u32 %v108, %v111
    %v114 = vmul.u32 %v109, %v110
    %v115 = vmul.u32 %v109, %v111
    %v116 = vshll.u32 %v113, 16
    %v117 = vshrl.u32 %v113, 16
    %v118 = vshll.u32 %v114, 16
    %v119 = vshrl.u32 %v114, 16
    %vm120 = vc.u32 %v112, %v116
    %v121 = vsel %vm120, 1, 0
    %v122 = vadd.s32 %v112, %v116
    %v123 = vadd.s32 %v115, %v121
    %vm124 = vc.u32 %v122, %v118
    %v125 = vsel %vm124, 1, 0
    %v126 = vadd.s32 %v122, %v118
    %v127 = vadd.s32 %v123, %v125
    %v128 = vadd.s32 %v127, %v117
    %v129 = vadd.s32 %v128, %v119
    %v130 = vmul.u32 %v85, %v76
    %v131 = vadd.s32 %v107, %v126
    %vm132 = vc.u32 %v107, %v126
    %v133 = vadd.s32 %v129, 1
    %v134 = vsel %vm132, %v133, %v129
    %v135 = vadd.s32 %v130, %v134
    %v136 = vadd.s32 %v135, 536870912
    %v137 = vshrl.u32 %v136, 30
    %v138 = vshll.u32 %v137, 30
    %v139 = vsub.s32 %v135, %v138
    %vm140 = vcmp.lt.s32.totalorder %v139, 0
    %v141 = vsub.s32 0, %v139
    %v142 = vsel %vm140, %v141, %v139
    %v143 = vclz %v142
    %v144 = vsub.s32 %v143, 2
    %vm145 = vcmp.gt.s32.totalorder 0, %v144
    %v146 = vsel %vm145, 0, %v144
    %v147 = vsub.s32 32, %v146
    %v148 = vshll.u32 %v139, %v146
    %v149 = vshrl.u32 %v131, %v147
    %v150 = vor.u32 %v148, %v149
    %v151 = vsub.s32 4294967266, %v146
    %v152 = vadd.s32 %v151, 127
    %v153 = vshll.u32 %v152, 23
    %v154 = vor.u32 4788187, %v153
    %v155 = vand.u32 2147483647, %v154
    %v157 = vcvt.s32.f32 %v150
    %v158 = vmul.f32 %v157, %v155
    %v159 = vxor.u32 %v158, 2147483648
    %v160 = vsel %vm39, %v159, %v158
    %v161 = vsub.s32 4, %v137
    %v162 = vsel %vm39, %v161, %v137
    %v163 = vsel %vm38, %v36, %v160
    %v164 = vsel %vm38, 0, %v162
    %v165 = vmul.f32 %v163, %v163
    %v166 = vmul.f32 %v165, -0.001358992
    %v167 = vadd.f32 %v166, 0.041655596
    %v168 = vmul.f32 %v165, %v167
    %v169 = vadd.f32 %v168, -0.4999988
    %v170 = vmul.f32 %v165, %v169
    %v171 = vadd.f32 1.0, %v170
    %v172 = vmul.f32 %v163, %v163
    %v173 = vmul.f32 %v172, -0.00019511016
    %v174 = vadd.f32 %v173, 0.008332121
    %v175 = vmul.f32 %v172, %v174
    %v176 = vadd.f32 %v175, -0.16666654
    %v177 = vmul.f32 %v172, %v176
    %v178 = vadd.f32 %v177, 1.0
    %v179 = vmul.f32 %v178, %v163
    %vm180 = vweird.f32 %v36
    %v181 = vadd.s32 %v164, 3
    %v182 = vand.u32 %v181, 3
    %vm183 = vcmp.lt.s32.totalorder %v182, 2
    %vm184 = vcmp.eq.s32.totalorder %v182, 0
    %v185 = vxor.u32 %v179, 2147483648
    %v186 = vsel %vm184, %v171, %v185
    %vm187 = vcmp.eq.s32.totalorder %v182, 2
    %v188 = vxor.u32 %v171, 2147483648
    %v189 = vsel %vm187, %v188, %v179
    %v190 = vsel %vm183, %v186, %v189
    %v191 = vsel %vm180, nan, %v190
    %192 = vst [vmem:[#allocation5] sm:$0xf] %v191
    // Predicated region
    $region10: #{tpu_custom_call.1} parent=1 // pred_check
      _
    $region11: #{tpu_custom_call.1} parent=1 // pred_check_branch
      %194 = sbr.rel (0) target = $region13
    $region12: #{tpu_custom_call.1} parent=1 // pred_region
      %196 = vsyncadd [#allocation4], 0
      %s198 = sshll.u32 [#allocation5], 4
      %s199 = int_to_ptr.vmem [resolvable:$true] %s198
      %s200 = sshll.u32 %s1, 4
      %s201 = int_to_ptr.hbm [resolvable:$true] %s200
      %203 = dma.vmem_to_hbm [thread:$0]  %s199, 64, %s201, [#allocation4]
    $region13: #{tpu_custom_call.1} parent=1 // pred_fallthru
      _
    // Predicated region
    $region14: #{tpu_custom_call.1} parent=1 // pred_check
      _
    $region15: #{tpu_custom_call.1} parent=1 // pred_check_branch
      %205 = sbr.rel (0) target = $region17
    $region16: #{tpu_custom_call.1} parent=1 // pred_region
      %207 = dma.done [#allocation4], 64
    $region17: #{tpu_custom_call.1} parent=1 // pred_fallthru
      _
    %208 = vsyncpa [#allocation3], 1
    %209 = vsyncpa [#allocation4], 1

</llo_original>
